<compile_context>
chip_gen: v7x
topology: tpu7x:2x2x1
jax: 0.10.0
libtpu: 0.0.40
codegen_flags: <defaults>
</compile_context>

<pallas_src>
import jax
import jax.numpy as jnp
from jax.experimental import pallas as pl
from jax.experimental.pallas import tpu as pltpu


def _round_up(x, m):
    return (x + m - 1) // m * m


def _gemm_bias_relu6_kernel(a_ref, w_ref, b_ref, o_ref):
    # a_ref: (TM, Kp)   im2col patch tile
    # w_ref: (Kp, TN)   BN-scale-folded conv weights tile
    # b_ref: (1, TN)    folded BN bias (f32)
    # o_ref: (TM, TN)   output tile (f32)
    acc = jnp.dot(a_ref[...], w_ref[...], preferred_element_type=jnp.float32)
    y = acc + b_ref[...]                      # broadcast bias add (f32 epilogue)
    o_ref[...] = jnp.clip(y, 0.0, 6.0).astype(o_ref.dtype)


def conv_bn_relu6(x_nchw, weight_oihw, gamma, beta, running_mean, running_var,
                  *, kernel_size=3, stride=1, dilation=1, eps=1e-5,
                  compute_dtype=jnp.float32, tile_m=128, tile_n=128):
    """Forward pass matching ConvBNReLU6 (eval-mode BN). Input/output are NCHW (PyTorch)."""
    N, Cin, H, W = x_nchw.shape
    Cout = weight_oihw.shape[0]
    pad = (stride - 1 + dilation * (kernel_size - 1)) // 2
    Ho = (H + 2 * pad - dilation * (kernel_size - 1) - 1) // stride + 1
    Wo = (W + 2 * pad - dilation * (kernel_size - 1) - 1) // stride + 1

    # ---- glue (plain JAX, fused by XLA): layout, padding, im2col, BN folding ----
    x_nhwc = jnp.transpose(x_nchw, (0, 2, 3, 1)).astype(jnp.float32)
    x_pad = jnp.pad(x_nhwc, ((0, 0), (pad, pad), (pad, pad), (0, 0)))

    cols = []
    for kh in range(kernel_size):
        for kw in range(kernel_size):
            h0 = kh * dilation
            w0 = kw * dilation
            cols.append(x_pad[:, h0:h0 + (Ho - 1) * stride + 1:stride,
                              w0:w0 + (Wo - 1) * stride + 1:stride, :])
    K = kernel_size * kernel_size * Cin
    M = N * Ho * Wo
    patches = jnp.concatenate(cols, axis=-1).reshape(M, K)      # (M, 9*Cin)

    # Fold eval-mode BatchNorm into the conv weights / bias.
    scale = (gamma / jnp.sqrt(running_var + eps)).astype(jnp.float32)   # (Cout,)
    bias = (beta - running_mean * scale).astype(jnp.float32)            # (Cout,)
    w_mat = jnp.transpose(weight_oihw, (2, 3, 1, 0)).astype(jnp.float32)  # (kh,kw,Cin,Cout)
    w_mat = w_mat.reshape(K, Cout) * scale[None, :]

    # Lane-dense / tile-friendly padding.
    TM, TN = tile_m, tile_n
    Kp = _round_up(K, 8)
    Cp = _round_up(Cout, TN)      # Cout -> multiple of 128 (lane-dense output stores)
    Mp = _round_up(M, TM)

    a = jnp.zeros((Mp, Kp), jnp.float32).at[:M, :K].set(patches).astype(compute_dtype)
    wp = jnp.zeros((Kp, Cp), jnp.float32).at[:K, :Cout].set(w_mat).astype(compute_dtype)
    bp = jnp.zeros((1, Cp), jnp.float32).at[0, :Cout].set(bias)

    grid = (Mp // TM, Cp // TN)
    cost = pl.CostEstimate(
        flops=2 * Mp * Kp * Cp,
        transcendentals=0,
        bytes_accessed=(a.size * a.dtype.itemsize
                        + wp.size * wp.dtype.itemsize
                        + bp.size * 4
                        + Mp * Cp * 4))

    out_mat = pl.pallas_call(
        _gemm_bias_relu6_kernel,
        out_shape=jax.ShapeDtypeStruct((Mp, Cp), jnp.float32),
        grid=grid,
        in_specs=[
            pl.BlockSpec((TM, Kp), lambda i, j: (i, 0)),   # patches: tile over rows, full K
            pl.BlockSpec((Kp, TN), lambda i, j: (0, j)),   # weights: full K, tile over Cout
            pl.BlockSpec((1, TN), lambda i, j: (0, j)),    # bias: tile over Cout
        ],
        out_specs=pl.BlockSpec((TM, TN), lambda i, j: (i, j)),
        compiler_params=pltpu.CompilerParams(
            dimension_semantics=("parallel", "parallel")),
        cost_estimate=cost,
    )(a, wp, bp)

    out = out_mat[:M, :Cout].reshape(N, Ho, Wo, Cout)
    return jnp.transpose(out, (0, 3, 1, 2))                 # back to NCHW


def _reference(x_nchw, weight_oihw, gamma, beta, running_mean, running_var,
               eps=1e-5):
    y = jax.lax.conv_general_dilated(
        x_nchw.astype(jnp.float32), weight_oihw.astype(jnp.float32),
        window_strides=(1, 1), padding=((1, 1), (1, 1)),
        dimension_numbers=("NCHW", "OIHW", "NCHW"))
    scale = gamma / jnp.sqrt(running_var + eps)
    bias = beta - running_mean * scale
    y = y * scale[None, :, None, None] + bias[None, :, None, None]
    return jnp.clip(y, 0.0, 6.0)


if __name__ == "__main__":
    key = jax.random.PRNGKey(0)
    k_x, k_w, k_g, k_b, k_m, k_v = jax.random.split(key, 6)

    N, Cin, Cout, H, W = 2, 4, 8, 16, 16

    x = jax.random.normal(k_x, (N, Cin, H, W), dtype=jnp.float32)
    weight = jax.random.normal(k_w, (Cout, Cin, 3, 3), dtype=jnp.float32) * 0.1
    gamma = 1.0 + 0.1 * jax.random.normal(k_g, (Cout,), dtype=jnp.float32)
    beta = 0.1 * jax.random.normal(k_b, (Cout,), dtype=jnp.float32)
    running_mean = 0.1 * jax.random.normal(k_m, (Cout,), dtype=jnp.float32)
    running_var = jnp.abs(jax.random.normal(k_v, (Cout,), dtype=jnp.float32)) + 0.5

    ref = _reference(x, weight, gamma, beta, running_mean, running_var)

    # f32 path (bit-accurate vs reference within fp tolerance)
    out = conv_bn_relu6(x, weight, gamma, beta, running_mean, running_var)
    out = jax.block_until_ready(out)
    assert out.shape == (N, Cout, H, W), out.shape
    assert jnp.allclose(out, ref, atol=1e-4, rtol=1e-4), float(jnp.max(jnp.abs(out - ref)))

    # bf16 compute path (activations/weights bf16, f32 accumulation + epilogue)
    out_bf16 = conv_bn_relu6(x, weight, gamma, beta, running_mean, running_var,
                             compute_dtype=jnp.bfloat16)
    out_bf16 = jax.block_until_ready(out_bf16)
    assert jnp.allclose(out_bf16, ref, atol=5e-2, rtol=5e-2), \
        float(jnp.max(jnp.abs(out_bf16 - ref)))

    print("KERNEL_OK")
</pallas_src>

<mosaic_0001>
module attributes {stable_mosaic.version = 11 : i64} {
  func.func @_gemm_bias_relu6_kernel(%arg0: i32, %arg1: i32, %arg2: memref<128x40xf32, #tpu.memory_space<vmem>>, %arg3: memref<40x128xf32, #tpu.memory_space<vmem>>, %arg4: memref<1x128xf32, #tpu.memory_space<vmem>>, %arg5: memref<128x128xf32, #tpu.memory_space<vmem>>) attributes {dimension_semantics = [#tpu.dimension_semantics<parallel>, #tpu.dimension_semantics<parallel>], iteration_bounds = array<i64: 4, 1>, scalar_prefetch = 0 : i64, scratch_operands = 0 : i64, tpu.core_type = #tpu.core_type<tc>, window_params = [{transform_indices = @transform_0, window_bounds = array<i64: 128, 40>}, {transform_indices = @transform_1, window_bounds = array<i64: 40, 128>}, {transform_indices = @transform_2, window_bounds = array<i64: 1, 128>}, {transform_indices = @transform_3, window_bounds = array<i64: 128, 128>}]} {
    %c0 = arith.constant 0 : index
    %c0_0 = arith.constant 0 : index
    %0 = vector.load %arg2[%c0, %c0_0] : memref<128x40xf32, #tpu.memory_space<vmem>>, vector<128x40xf32>
    %c0_1 = arith.constant 0 : index
    %c0_2 = arith.constant 0 : index
    %1 = vector.load %arg3[%c0_1, %c0_2] : memref<40x128xf32, #tpu.memory_space<vmem>>, vector<40x128xf32>
    %cst = arith.constant dense<0.000000e+00> : vector<128x128xf32>
    %2 = tpu.matmul %0, %1, %cst {dimension_numbers = #tpu.dot_dimension_numbers<[1], [0], [0], [1], [0, 0, 1, 1], [], []>} : vector<128x40xf32>, vector<40x128xf32>, vector<128x128xf32> -> vector<128x128xf32>
    %c0_3 = arith.constant 0 : index
    %c0_4 = arith.constant 0 : index
    %3 = vector.load %arg4[%c0_3, %c0_4] : memref<1x128xf32, #tpu.memory_space<vmem>>, vector<1x128xf32>
    %4 = vector.broadcast %3 : vector<1x128xf32> to vector<128x128xf32>
    %5 = arith.addf %2, %4 : vector<128x128xf32>
    %cst_5 = arith.constant 0.000000e+00 : f32
    %cst_6 = arith.constant 6.000000e+00 : f32
    %6 = vector.broadcast %cst_5 : f32 to vector<128x128xf32>
    %7 = arith.maximumf %6, %5 : vector<128x128xf32>
    %8 = vector.broadcast %cst_6 : f32 to vector<128x128xf32>
    %9 = arith.minimumf %8, %7 : vector<128x128xf32>
    %c0_7 = arith.constant 0 : index
    %c0_8 = arith.constant 0 : index
    %10 = vector.load %arg5[%c0_7, %c0_8] : memref<128x128xf32, #tpu.memory_space<vmem>>, vector<128x128xf32>
    tpu.vector_store %arg5[%c0_7, %c0_8], %9 {strides = array<i32>} : memref<128x128xf32, #tpu.memory_space<vmem>>, vector<128x128xf32>,
    return
  }
  func.func @transform_0(%arg0: i32, %arg1: i32) -> (i32, i32) {
    %c0_i32 = arith.constant 0 : i32
    %c0_i32_0 = arith.constant 0 : i32
    return %arg0, %c0_i32 : i32, i32
  }
  func.func @transform_1(%arg0: i32, %arg1: i32) -> (i32, i32) {
    %c0_i32 = arith.constant 0 : i32
    %c0_i32_0 = arith.constant 0 : i32
    return %c0_i32, %arg1 : i32, i32
  }
  func.func @transform_2(%arg0: i32, %arg1: i32) -> (i32, i32) {
    %c0_i32 = arith.constant 0 : i32
    %c0_i32_0 = arith.constant 0 : i32
    return %c0_i32, %arg1 : i32, i32
  }
  func.func @transform_3(%arg0: i32, %arg1: i32) -> (i32, i32) {
    %c0_i32 = arith.constant 0 : i32
    return %arg0, %arg1 : i32, i32
  }
}

</mosaic_0001>

<llo_original>
// kernel: tpu_custom_call.1
$region0: #{tpu_custom_call.1}
  #allocation0 [shape = 'u32[]', space=smem, size = 0x4, offset = 0x4, fixed_abs, tag = 'smem constant byte address 0x4 - core index']
  #allocation1 [shape = 'u32[144,128]{1,0:T(1,128)}', space=vmem, size = 0x12000, scoped, tag = 'internal scratch']
  %s0 = inlined_call_operand.vmem [shape: f32[512,40], index: 0, kind: input, shape index: {}]
  %s1 = inlined_call_operand.vmem [shape: f32[40,128], index: 1, kind: input, shape index: {}]
  %s2 = inlined_call_operand.vmem [shape: f32[1,128], index: 2, kind: input, shape index: {}]
  %s3 = inlined_call_operand.hbm [shape: f32[512,128], index: 3, kind: output, shape index: {}]
  %s4 = sld [smem:[#allocation0]]
  $region45: #{tpu_custom_call.1} parent=0
    _
  %s6 = ssub.s32 1, %s4
  %s7 = scalar_select 0, %s6, %s4
  $region1: #{tpu_custom_call.1} parent=0
    #allocation2 [shape = 'u8[131072]{0}', space=vmem, size = 0x20000, scoped, tag = 'output window, operand 0']
    #allocation3 [shape = 's32[2]{0}', space=sflag, size = 0x8, scoped, tag = 'scoped memory for tpu_custom_call.1']
    %8 = vsyncpa [#allocation3], 0
    %s9 = scalar_lea.sflag [#allocation3], 1
    %10 = vsyncpa %s9, 0
    loop: start=0, step=1, limit=6
    $region2: #{tpu_custom_call.1} parent=1 // loop_pre_header
      _
    $region3: #{tpu_custom_call.1} parent=1 // loop_header
      %s12 = sphi 0, %s16
      %p13 = scmp.ge.s32.totalorder %s12, 6
      %s19 = sphi 0, %s31
      %s20 = sphi 0, %s27
      %s21 = sphi 0, %s19
      %s22 = sphi 0, %s20
      %s23 = sphi 0, %s21
      %s24 = sphi 0, %s22
      %s34 = sphi 0, %s36
      %s37 = sphi 0, %s34
      %s38 = sphi 0, %s37
      %s54 = sphi 0, %s38
      %s60 = sphi 0, %s62
      %s63 = sphi 0, %s60
      %s64 = sphi 0, %s63
      %s80 = sphi 0, %s64
      %s86 = sphi 0, %s88
      %s89 = sphi 0, %s86
      %s90 = sphi 0, %s89
      %s106 = sphi 0, %s90
      %s114 = sphi 0, %s116
      %s117 = sphi 0, %s114
      %s118 = sphi 0, %s117
      %s134 = sphi 0, %s118
    $region4: #{tpu_custom_call.1} parent=1 // loop_header_branch
      %15 = sbr.rel (%p13) target = $region8
    $region5: #{tpu_custom_call.1} parent=1 // loop_body
      %s17 = ssub.s32 %s12, 1
      %s18 = ssub.s32 %s12, 2
      %s25 = sadd.s32 1, %s20
      %p26 = scmp.ge.s32.totalorder %s25, 1
      %s27 = scalar_select %p26, 0, %s25
      %s28 = sadd.s32 1, %s19
      %s29 = scalar_select %p26, %s28, %s19
      %p30 = scmp.ge.s32.totalorder %s29, 4
      %s31 = scalar_select %p30, 0, %s29
      %s32 = ssub.s32 %s19, %s31
      %p33 = scmp.eq.s32.totalorder %s32, 0
      %s35 = sadd.s32 %s34, 1
      %s36 = scalar_select %p33, %s34, %s35
      %p39 = pneg %p33
      %p40 = scmp.eq.s32.totalorder %s12, 3
      %p41 = por %p39, %p40
      %p42 = scmp.ne.s32.totalorder %s34, %s37
      %p43 = scmp.eq.s32.totalorder %s12, 0
      %p44 = por %p42, %p43
      %p45 = scmp.ne.s32.totalorder %s34, %s37
      %p46 = scmp.eq.s32.totalorder %s17, 3
      %p47 = por %p45, %p46
      %p48 = scmp.ne.s32.totalorder %s37, %s38
      %p49 = scmp.eq.s32.totalorder %s17, 0
      %p50 = por %p48, %p49
      %p51 = scmp.ne.s32.totalorder %s37, %s38
      %p52 = scmp.eq.s32.totalorder %s18, 3
      %p53 = por %p51, %p52
      %p55 = scmp.ne.s32.totalorder %s38, %s54
      %p56 = scmp.eq.s32.totalorder %s18, 0
      %p57 = por %p55, %p56
      %s58 = ssub.s32 %s20, %s27
      %p59 = scmp.eq.s32.totalorder %s58, 0
      %s61 = sadd.s32 %s60, 1
      %s62 = scalar_select %p59, %s60, %s61
      %p65 = pneg %p59
      %p66 = scmp.eq.s32.totalorder %s12, 3
      %p67 = por %p65, %p66
      %p68 = scmp.ne.s32.totalorder %s60, %s63
      %p69 = scmp.eq.s32.totalorder %s12, 0
      %p70 = por %p68, %p69
      %p71 = scmp.ne.s32.totalorder %s60, %s63
      %p72 = scmp.eq.s32.totalorder %s17, 3
      %p73 = por %p71, %p72
      %p74 = scmp.ne.s32.totalorder %s63, %s64
      %p75 = scmp.eq.s32.totalorder %s17, 0
      %p76 = por %p74, %p75
      %p77 = scmp.ne.s32.totalorder %s63, %s64
      %p78 = scmp.eq.s32.totalorder %s18, 3
      %p79 = por %p77, %p78
      %p81 = scmp.ne.s32.totalorder %s64, %s80
      %p82 = scmp.eq.s32.totalorder %s18, 0
      %p83 = por %p81, %p82
      %s84 = ssub.s32 %s20, %s27
      %p85 = scmp.eq.s32.totalorder %s84, 0
      %s87 = sadd.s32 %s86, 1
      %s88 = scalar_select %p85, %s86, %s87
      %p91 = pneg %p85
      %p92 = scmp.eq.s32.totalorder %s12, 3
      %p93 = por %p91, %p92
      %p94 = scmp.ne.s32.totalorder %s86, %s89
      %p95 = scmp.eq.s32.totalorder %s12, 0
      %p96 = por %p94, %p95
      %p97 = scmp.ne.s32.totalorder %s86, %s89
      %p98 = scmp.eq.s32.totalorder %s17, 3
      %p99 = por %p97, %p98
      %p100 = scmp.ne.s32.totalorder %s89, %s90
      %p101 = scmp.eq.s32.totalorder %s17, 0
      %p102 = por %p100, %p101
      %p103 = scmp.ne.s32.totalorder %s89, %s90
      %p104 = scmp.eq.s32.totalorder %s18, 3
      %p105 = por %p103, %p104
      %p107 = scmp.ne.s32.totalorder %s90, %s106
      %p108 = scmp.eq.s32.totalorder %s18, 0
      %p109 = por %p107, %p108
      %s110 = ssub.s32 %s19, %s31
      %s111 = ssub.s32 %s20, %s27
      %s112 = sor.u32 %s110, %s111
      %p113 = scmp.eq.s32.totalorder %s112, 0
      %s115 = sadd.s32 %s114, 1
      %s116 = scalar_select %p113, %s114, %s115
      %p119 = pneg %p113
      %p120 = scmp.eq.s32.totalorder %s12, 3
      %p121 = por %p119, %p120
      %p122 = scmp.ne.s32.totalorder %s114, %s117
      %p123 = scmp.eq.s32.totalorder %s12, 0
      %p124 = por %p122, %p123
      %p125 = scmp.ne.s32.totalorder %s114, %s117
      %p126 = scmp.eq.s32.totalorder %s17, 3
      %p127 = por %p125, %p126
      %p128 = scmp.ne.s32.totalorder %s117, %s118
      %p129 = scmp.eq.s32.totalorder %s17, 0
      %p130 = por %p128, %p129
      %p131 = scmp.ne.s32.totalorder %s117, %s118
      %p132 = scmp.eq.s32.totalorder %s18, 3
      %p133 = por %p131, %p132
      %p135 = scmp.ne.s32.totalorder %s118, %s134
      %p136 = scmp.eq.s32.totalorder %s18, 0
      %p137 = por %p135, %p136
      %p138 = scmp.le.s32.totalorder 1, %s12
      %p139 = scmp.lt.s32.totalorder %s12, 5
      %p140 = pnand %p138, %p139
      %p141 = pneg %p140
      // Predicated region
      $region9: #{tpu_custom_call.1} parent=5 // pred_check
        _
      $region10: #{tpu_custom_call.1} parent=5 // pred_check_branch
        %143 = sbr.rel (%p140) target = $region12
      $region11: #{tpu_custom_call.1} parent=5 // pred_region
        %s144 = ssub.s32 %s12, 1
        // Predicated region
        $region13: #{tpu_custom_call.1} parent=11 // pred_check
          %p145 = pneg %p76
        $region14: #{tpu_custom_call.1} parent=11 // pred_check_branch
          %147 = sbr.rel (%p145) target = $region16
        $region15: #{tpu_custom_call.1} parent=11 // pred_region
          %p148 = scmp.lt.s32.totalorder %s22, 0
          %s149 = scalar_select %p148, %s22, 0
          %s150 = smul.addr %s149, 8
          %s151 = scalar_lea.vmem %s1, %s150
        $region16: #{tpu_custom_call.1} parent=11 // pred_fallthru
          _
        // Predicated region
        $region17: #{tpu_custom_call.1} parent=11 // pred_check
          %p152 = pneg %p102
        $region18: #{tpu_custom_call.1} parent=11 // pred_check_branch
          %154 = sbr.rel (%p152) target = $region20
        $region19: #{tpu_custom_call.1} parent=11 // pred_region
          %p155 = scmp.lt.s32.totalorder %s22, 0
          %s156 = scalar_select %p155, %s22, 0
          %s157 = scalar_lea.vmem %s2, %s156
        $region20: #{tpu_custom_call.1} parent=11 // pred_fallthru
          _
      $region12: #{tpu_custom_call.1} parent=5 // pred_fallthru
        _
      %p158 = scmp.lt.s32.totalorder %s12, 4
      // Predicated region
      $region21: #{tpu_custom_call.1} parent=5 // pred_check
        %p159 = pneg %p158
      $region22: #{tpu_custom_call.1} parent=5 // pred_check_branch
        %161 = sbr.rel (%p159) target = $region24
      $region23: #{tpu_custom_call.1} parent=5 // pred_region
        // Predicated region
        $region25: #{tpu_custom_call.1} parent=23 // pred_check
          %p162 = pneg %p44
        $region26: #{tpu_custom_call.1} parent=23 // pred_check_branch
          %164 = sbr.rel (%p162) target = $region28
        $region27: #{tpu_custom_call.1} parent=23 // pred_region
          %s165 = smul.u32 16, %s19
          %p166 = scmp.lt.s32.totalorder %s165, 63
          %s167 = scalar_select %p166, %s165, 63
          %s168 = smul.addr %s167, 8
          %s169 = scalar_lea.vmem %s0, %s168
          %s170 = smul.u32 16, %s19
        $region28: #{tpu_custom_call.1} parent=23 // pred_fallthru
          _
      $region24: #{tpu_custom_call.1} parent=5 // pred_fallthru
        _
      %p171 = scmp.le.s32.totalorder 1, %s12
      %p172 = scmp.lt.s32.totalorder %s12, 5
      %p173 = pnand %p171, %p172
      %p174 = pneg %p173
      // Predicated region
      $region29: #{tpu_custom_call.1} parent=5 // pred_check
        _
      $region30: #{tpu_custom_call.1} parent=5 // pred_check_branch
        %176 = sbr.rel (%p173) target = $region32
      $region31: #{tpu_custom_call.1} parent=5 // pred_region
        %s177 = ssub.s32 %s12, 1
        %s178 = smul.u32 16, %s21
        %p179 = scmp.lt.s32.totalorder %s178, 63
        %s180 = scalar_select %p179, %s178, 63
        %s181 = smul.addr %s180, 8
        %s182 = scalar_lea.vmem %s0, %s181
        %p183 = pneg %p50
        %p184 = pneg %p47
        %p185 = scmp.lt.s32.totalorder %s22, 0
        %s186 = scalar_select %p185, %s22, 0
        %s187 = smul.addr %s186, 8
        %s188 = scalar_lea.vmem %s1, %s187
        %p189 = pneg %p76
        %p190 = pneg %p73
        %p191 = scmp.lt.s32.totalorder %s22, 0
        %s192 = scalar_select %p191, %s22, 0
        %s193 = scalar_lea.vmem %s2, %s192
        %p194 = pneg %p102
        %p195 = pneg %p99
        %p196 = pneg %p130
        %p197 = pneg %p127
        %s198 = sand.u32 %s117, 1
        %s199 = scalar_lea.sflag [#allocation3], %s198
        %s200 = sand.u32 %s117, 1
        %s201 = smul.addr %s200, 128
        %s202 = scalar_lea.vmem [#allocation2], %s201
        %s203 = smul.u32 16, %s21
        %p204 = scmp.lt.s32.totalorder %s203, 63
        %s205 = scalar_select %p204, %s203, 63
        %s206 = smul.addr %s205, 8
        %s207 = scalar_lea.vmem %s0, %s206
        %s208 = smul.u32 16, %s21
        %p209 = scmp.lt.s32.totalorder %s22, 0
        %s210 = scalar_select %p209, %s22, 0
        %s211 = smul.addr %s210, 8
        %s212 = scalar_lea.vmem %s1, %s211
        %p213 = scmp.lt.s32.totalorder %s22, 0
        %s214 = scalar_select %p213, %s22, 0
        %s215 = scalar_lea.vmem %s2, %s214
        %s216 = smul.u32 16, %s21
        %v217 = vld [vmem:[%s207] sm:$0xff]
        %v218 = vld [vmem:[%s207 + $0x8] sm:$0xff]
        %v219 = vld [vmem:[%s207 + $0x10] sm:$0xff]
        %v220 = vld [vmem:[%s207 + $0x18] sm:$0xff]
        %v221 = vld [vmem:[%s207 + $0x20] sm:$0xff]
        %v222 = vld [vmem:[%s207 + $0x28] sm:$0xff]
        %v223 = vld [vmem:[%s207 + $0x30] sm:$0xff]
        %v224 = vld [vmem:[%s207 + $0x38] sm:$0xff]
        %v225 = vld [vmem:[%s207 + $0x40] sm:$0xff]
        %v226 = vld [vmem:[%s207 + $0x48] sm:$0xff]
        %v227 = vld [vmem:[%s207 + $0x50] sm:$0xff]
        %v228 = vld [vmem:[%s207 + $0x58] sm:$0xff]
        %v229 = vld [vmem:[%s207 + $0x60] sm:$0xff]
        %v230 = vld [vmem:[%s207 + $0x68] sm:$0xff]
        %v231 = vld [vmem:[%s207 + $0x70] sm:$0xff]
        %v232 = vld [vmem:[%s207 + $0x78] sm:$0xff]
        %v233 = vld [vmem:[%s212] sm:$0xff]
        %v234 = vld [vmem:[%s212 + $0x8] sm:$0xff]
        %v235 = vld [vmem:[%s212 + $0x10] sm:$0xff]
        %v236 = vld [vmem:[%s212 + $0x18] sm:$0xff]
        %v237 = vld [vmem:[%s212 + $0x20] sm:$0xff]
        %v238 = vld [vmem:[%s215] sm:$0x1]
        %v240 = vlaneseq
        %v241 = vshrl.u32 %v240, 7
        %v242 = vsub.s32 0, %v241
        %v243 = vrot.slane %v238, %v242
        %vm245 = vcmask 326656
        %v247 = vsel %vm245, %v217, 0
        %v250 = vsel %vm245, %v218, 0
        %v253 = vsel %vm245, %v219, 0
        %v256 = vsel %vm245, %v220, 0
        %v259 = vsel %vm245, %v221, 0
        %v262 = vsel %vm245, %v222, 0
        %v265 = vsel %vm245, %v223, 0
        %v268 = vsel %vm245, %v224, 0
        %v271 = vsel %vm245, %v225, 0
        %v274 = vsel %vm245, %v226, 0
        %v277 = vsel %vm245, %v227, 0
        %v280 = vsel %vm245, %v228, 0
        %v283 = vsel %vm245, %v229, 0
        %v286 = vsel %vm245, %v230, 0
        %v289 = vsel %vm245, %v231, 0
        %v292 = vsel %vm245, %v232, 0
        %294 = vmatprep.subr.mxu0 0.0
        %295 = vmatpush1.msra.mxu0 %v233
        %296 = vmatprep.subr.mxu0 0.0
        %297 = vmatpush1.msra.mxu0 %v234
        %298 = vmatprep.subr.mxu0 0.0
        %299 = vmatpush1.msra.mxu0 %v235
        %300 = vmatprep.subr.mxu0 0.0
        %301 = vmatpush1.msra.mxu0 %v236
        %302 = vmatprep.subr.mxu0 0.0
        %303 = vmatpush1.msra.mxu0 %v237
        %304 = vmatprep.subr.mxu0 0.0
        %305 = vmatpush1.msra.mxu0 0.0
        %306 = vmatprep.subr.mxu0 0.0
        %307 = vmatpush1.msra.mxu0 0.0
        %308 = vmatprep.subr.mxu0 0.0
        %309 = vmatpush1.msra.mxu0 0.0
        %310 = vmatprep.subr.mxu0 0.0
        %311 = vmatpush1.msra.mxu0 0.0
        %312 = vmatprep.subr.mxu0 0.0
        %313 = vmatpush1.msra.mxu0 0.0
        %314 = vmatprep.subr.mxu0 0.0
        %315 = vmatpush1.msra.mxu0 0.0
        %316 = vmatprep.subr.mxu0 0.0
        %317 = vmatpush1.msra.mxu0 0.0
        %318 = vmatprep.subr.mxu0 0.0
        %319 = vmatpush1.msra.mxu0 0.0
        %320 = vmatprep.subr.mxu0 0.0
        %321 = vmatpush1.msra.mxu0 0.0
        %322 = vmatprep.subr.mxu0 0.0
        %323 = vmatpush1.msra.mxu0 0.0
        %324 = vmatprep.subr.mxu0 0.0
        %325 = vmatpush1.msra.mxu0 0.0
        %326 = vmatprep.subr.mxu0 0.0
        %327 = vmatpush1.msra.mxu0 0.0
        %328 = vmatprep.subr.mxu0 0.0
        %329 = vmatpush1.msra.mxu0 0.0
        %330 = vmatprep.subr.mxu0 0.0
        %331 = vmatpush1.msra.mxu0 0.0
        %332 = vmatprep.subr.mxu0 0.0
        %333 = vmatpush1.msra.mxu0 0.0
        %334 = vmatprep.subr.mxu0 0.0
        %335 = vmatpush1.msra.mxu0 0.0
        %336 = vmatprep.subr.mxu0 0.0
        %337 = vmatpush1.msra.mxu0 0.0
        %338 = vmatprep.subr.mxu0 0.0
        %339 = vmatpush1.msra.mxu0 0.0
        %340 = vmatprep.subr.mxu0 0.0
        %341 = vmatpush1.msra.mxu0 0.0
        %342 = vmatprep.subr.mxu0 0.0
        %343 = vmatpush1.msra.mxu0 0.0
        %344 = vmatprep.subr.mxu0 0.0
        %345 = vmatpush1.msra.mxu0 0.0
        %346 = vmatprep.subr.mxu0 0.0
        %347 = vmatpush1.msra.mxu0 0.0
        %348 = vmatprep.subr.mxu0 0.0
        %349 = vmatpush1.msra.mxu0 0.0
        %350 = vmatprep.subr.mxu0 0.0
        %351 = vmatpush1.msra.mxu0 0.0
        %352 = vmatprep.subr.mxu0 0.0
        %353 = vmatpush1.msra.mxu0 0.0
        %354 = vmatprep.subr.mxu0 0.0
        %355 = vmatpush1.msra.mxu0 0.0
        %356 = vmatprep.subr.mxu0 0.0
        %357 = vmatpush1.msra.mxu0 0.0
        %358 = vmatprep.mubr.f32.mxu0 0.0
        %359 = vmatmul.mubr.f32.gmra.mrb[0].mxu0 %v247
        %v360 = vpop.f32.mrb[0].mxu0
        %v361 = vadd.f32 %v243, %v360
        %v362 = vpop.f32.mrb[0].mxu0
        %363 = vmatprep.mubr.f32.mxu0 0.0
        %364 = vmatmul.mubr.f32.gmra.mrb[0].mxu0 %v250
        %v365 = vpop.f32.mrb[0].mxu0
        %v366 = vadd.f32 %v243, %v365
        %v367 = vpop.f32.mrb[0].mxu0
        %368 = vmatprep.mubr.f32.mxu0 0.0
        %369 = vmatmul.mubr.f32.gmra.mrb[0].mxu0 %v253
        %v370 = vpop.f32.mrb[0].mxu0
        %v371 = vadd.f32 %v243, %v370
        %v372 = vpop.f32.mrb[0].mxu0
        %373 = vmatprep.mubr.f32.mxu0 0.0
        %374 = vmatmul.mubr.f32.gmra.mrb[0].mxu0 %v256
        %v375 = vpop.f32.mrb[0].mxu0
        %v376 = vadd.f32 %v243, %v375
        %v377 = vpop.f32.mrb[0].mxu0
        %378 = vmatprep.mubr.f32.mxu0 0.0
        %379 = vmatmul.mubr.f32.gmra.mrb[0].mxu0 %v259
        %v380 = vpop.f32.mrb[0].mxu0
        %v381 = vadd.f32 %v243, %v380
        %v382 = vpop.f32.mrb[0].mxu0
        %383 = vmatprep.mubr.f32.mxu0 0.0
        %384 = vmatmul.mubr.f32.gmra.mrb[0].mxu0 %v262
        %v385 = vpop.f32.mrb[0].mxu0
        %v386 = vadd.f32 %v243, %v385
        %v387 = vpop.f32.mrb[0].mxu0
        %388 = vmatprep.mubr.f32.mxu0 0.0
        %389 = vmatmul.mubr.f32.gmra.mrb[0].mxu0 %v265
        %v390 = vpop.f32.mrb[0].mxu0
        %v391 = vadd.f32 %v243, %v390
        %v392 = vpop.f32.mrb[0].mxu0
        %393 = vmatprep.mubr.f32.mxu0 0.0
        %394 = vmatmul.mubr.f32.gmra.mrb[0].mxu0 %v268
        %v395 = vpop.f32.mrb[0].mxu0
        %v396 = vadd.f32 %v243, %v395
        %v397 = vpop.f32.mrb[0].mxu0
        %398 = vmatprep.mubr.f32.mxu0 0.0
        %399 = vmatmul.mubr.f32.gmra.mrb[0].mxu0 %v271
        %v400 = vpop.f32.mrb[0].mxu0
        %v401 = vadd.f32 %v243, %v400
        %v402 = vpop.f32.mrb[0].mxu0
        %403 = vmatprep.mubr.f32.mxu0 0.0
        %404 = vmatmul.mubr.f32.gmra.mrb[0].mxu0 %v274
        %v405 = vpop.f32.mrb[0].mxu0
        %v406 = vadd.f32 %v243, %v405
        %v407 = vpop.f32.mrb[0].mxu0
        %408 = vmatprep.mubr.f32.mxu0 0.0
        %409 = vmatmul.mubr.f32.gmra.mrb[0].mxu0 %v277
        %v410 = vpop.f32.mrb[0].mxu0
        %v411 = vadd.f32 %v243, %v410
        %v412 = vpop.f32.mrb[0].mxu0
        %413 = vmatprep.mubr.f32.mxu0 0.0
        %414 = vmatmul.mubr.f32.gmra.mrb[0].mxu0 %v280
        %v415 = vpop.f32.mrb[0].mxu0
        %v416 = vadd.f32 %v243, %v415
        %v417 = vpop.f32.mrb[0].mxu0
        %418 = vmatprep.mubr.f32.mxu0 0.0
        %419 = vmatmul.mubr.f32.gmra.mrb[0].mxu0 %v283
        %v420 = vpop.f32.mrb[0].mxu0
        %v421 = vadd.f32 %v243, %v420
        %v422 = vpop.f32.mrb[0].mxu0
        %423 = vmatprep.mubr.f32.mxu0 0.0
        %424 = vmatmul.mubr.f32.gmra.mrb[0].mxu0 %v286
        %v425 = vpop.f32.mrb[0].mxu0
        %v426 = vadd.f32 %v243, %v425
        %v427 = vpop.f32.mrb[0].mxu0
        %428 = vmatprep.mubr.f32.mxu0 0.0
        %429 = vmatmul.mubr.f32.gmra.mrb[0].mxu0 %v289
        %v430 = vpop.f32.mrb[0].mxu0
        %v431 = vadd.f32 %v243, %v430
        %v432 = vpop.f32.mrb[0].mxu0
        %433 = vmatprep.mubr.f32.mxu0 0.0
        %434 = vmatmul.mubr.f32.gmra.mrb[0].mxu0 %v292
        %v435 = vpop.f32.mrb[0].mxu0
        %v436 = vadd.f32 %v243, %v435
        %v437 = vpop.f32.mrb[0].mxu0
        %438 = vdwg.mxu0
        %v439 = vmax.f32 %v361, 0.0
        %v440 = vmax.f32 %v366, 0.0
        %v441 = vmax.f32 %v371, 0.0
        %v442 = vmax.f32 %v376, 0.0
        %v443 = vmax.f32 %v381, 0.0
        %v444 = vmax.f32 %v386, 0.0
        %v445 = vmax.f32 %v391, 0.0
        %v446 = vmax.f32 %v396, 0.0
        %v447 = vmax.f32 %v401, 0.0
        %v448 = vmax.f32 %v406, 0.0
        %v449 = vmax.f32 %v411, 0.0
        %v450 = vmax.f32 %v416, 0.0
        %v451 = vmax.f32 %v421, 0.0
        %v452 = vmax.f32 %v426, 0.0
        %v453 = vmax.f32 %v431, 0.0
        %v454 = vmax.f32 %v436, 0.0
        %v455 = vmin.f32 %v439, 6.0
        %v456 = vmin.f32 %v440, 6.0
        %v457 = vmin.f32 %v441, 6.0
        %v458 = vmin.f32 %v442, 6.0
        %v459 = vmin.f32 %v443, 6.0
        %v460 = vmin.f32 %v444, 6.0
        %v461 = vmin.f32 %v445, 6.0
        %v462 = vmin.f32 %v446, 6.0
        %v463 = vmin.f32 %v447, 6.0
        %v464 = vmin.f32 %v448, 6.0
        %v465 = vmin.f32 %v449, 6.0
        %v466 = vmin.f32 %v450, 6.0
        %v467 = vmin.f32 %v451, 6.0
        %v468 = vmin.f32 %v452, 6.0
        %v469 = vmin.f32 %v453, 6.0
        %v470 = vmin.f32 %v454, 6.0
        %471 = vst [vmem:[%s202] sm:$0xff] %v455
        %472 = vst [vmem:[%s202 + $0x8] sm:$0xff] %v456
        %473 = vst [vmem:[%s202 + $0x10] sm:$0xff] %v457
        %474 = vst [vmem:[%s202 + $0x18] sm:$0xff] %v458
        %475 = vst [vmem:[%s202 + $0x20] sm:$0xff] %v459
        %476 = vst [vmem:[%s202 + $0x28] sm:$0xff] %v460
        %477 = vst [vmem:[%s202 + $0x30] sm:$0xff] %v461
        %478 = vst [vmem:[%s202 + $0x38] sm:$0xff] %v462
        %479 = vst [vmem:[%s202 + $0x40] sm:$0xff] %v463
        %480 = vst [vmem:[%s202 + $0x48] sm:$0xff] %v464
        %481 = vst [vmem:[%s202 + $0x50] sm:$0xff] %v465
        %482 = vst [vmem:[%s202 + $0x58] sm:$0xff] %v466
        %483 = vst [vmem:[%s202 + $0x60] sm:$0xff] %v467
        %484 = vst [vmem:[%s202 + $0x68] sm:$0xff] %v468
        %485 = vst [vmem:[%s202 + $0x70] sm:$0xff] %v469
        %486 = vst [vmem:[%s202 + $0x78] sm:$0xff] %v470
        %s487 = sand.u32 %s117, 1
        %s488 = scalar_lea.sflag [#allocation3], %s487
        %s489 = sand.u32 %s117, 1
        %s490 = smul.addr %s489, 128
        %s491 = scalar_lea.vmem [#allocation2], %s490
        // Predicated region
        $region33: #{tpu_custom_call.1} parent=31 // pred_check
          %p492 = pneg %p127
        $region34: #{tpu_custom_call.1} parent=31 // pred_check_branch
          %494 = sbr.rel (%p492) target = $region36
        $region35: #{tpu_custom_call.1} parent=31 // pred_region
          %s495 = smul.u32 16, %s21
          %s497 = ssub.s32 2048, 2048
          %498 = vsyncadd %s488, %s497
          %s499 = sadd.s32 %s22, %s495
          %s500 = smul.addr %s499, 128
          %s501 = scalar_lea.hbm %s3, %s500
          %s502 = sshll.u32 %s491, 4
          %s503 = int_to_ptr.vmem [resolvable:$true] %s502
          %508 = dma.vmem_to_hbm [thread:$0]  %s503, 2048, %s501, %s488, 128, 128, 8
        $region36: #{tpu_custom_call.1} parent=31 // pred_fallthru
          _
      $region32: #{tpu_custom_call.1} parent=5 // pred_fallthru
        _
      %p509 = scmp.le.s32.totalorder 2, %s12
      // Predicated region
      $region37: #{tpu_custom_call.1} parent=5 // pred_check
        %p510 = pneg %p509
      $region38: #{tpu_custom_call.1} parent=5 // pred_check_branch
        %512 = sbr.rel (%p510) target = $region40
      $region39: #{tpu_custom_call.1} parent=5 // pred_region
        %s513 = ssub.s32 %s12, 2
        // Predicated region
        $region41: #{tpu_custom_call.1} parent=39 // pred_check
          %p514 = pneg %p133
        $region42: #{tpu_custom_call.1} parent=39 // pred_check_branch
          %516 = sbr.rel (%p514) target = $region44
        $region43: #{tpu_custom_call.1} parent=39 // pred_region
          %s517 = sand.u32 %s118, 1
          %s518 = scalar_lea.sflag [#allocation3], %s517
          %s519 = sand.u32 %s118, 1
          %s520 = smul.addr %s519, 128
          %s521 = scalar_lea.vmem [#allocation2], %s520
          %522 = dma.done %s518, 2048
        $region44: #{tpu_custom_call.1} parent=39 // pred_fallthru
          _
      $region40: #{tpu_custom_call.1} parent=5 // pred_fallthru
        _
    $region6: #{tpu_custom_call.1} parent=1 // loop_footer
      %s16 = sadd.s32 1, %s12
    $region7: #{tpu_custom_call.1} parent=1 // loop_footer_branch
      %11 = sbr.rel target = $region3
    $region8: #{tpu_custom_call.1} parent=1 // loop_exit
      _
    %523 = vsyncpa [#allocation3], 1
    %s524 = scalar_lea.sflag [#allocation3], 1
    %525 = vsyncpa %s524, 1

</llo_original>
